<compile_context>
chip_gen: v6e
topology: v6e:2x2x1
jax: 0.10.0
libtpu: 0.0.40
codegen_flags: <defaults>
</compile_context>

<pallas_src>
import functools

import jax
import jax.numpy as jnp
from jax import lax
from jax.experimental import pallas as pl
from jax.experimental.pallas import tpu as pltpu


def _round_up(x: int, m: int) -> int:
    return ((x + m - 1) // m) * m


def _conv_deep_set_kernel(cx_ref, tx_ref, yT_ref, coef_ref, wT_ref, b_ref,
                          out_ref, acc_ref, *,
                          cin: int, use_density: bool, use_density_norm: bool):
    # cx_ref  : (1, tn, 1)    context x locations (N tile on sublanes)
    # tx_ref  : (1, 1, tm)    target x locations  (M tile on lanes)
    # yT_ref  : (1, cin, tn)  context y, channel-major (N lane-dense)
    # coef_ref: (1, C)        per-channel -0.5 / exp(sigma)^2
    # wT_ref  : (Cout, C)     projection weight (PyTorch layout)
    # b_ref   : (Cout, 1)     projection bias
    # out_ref : (1, Cout, tm) lane-dense output tile
    # acc_ref : (C, tm)       VMEM accumulator over the N (reduction) grid axis
    k = pl.program_id(2)

    @pl.when(k == 0)
    def _init():
        acc_ref[...] = jnp.zeros_like(acc_ref)

    cx = cx_ref[0]                          # (tn, 1)
    tx = tx_ref[0]                          # (1, tm)
    d = (cx - tx) ** 2                      # (tn, tm): N on sublanes, M on lanes
    coef = coef_ref[...]                    # (1, C)
    tn = d.shape[0]

    rows = []
    ch0 = 0
    if use_density:
        # Density channel: sum_n exp(coef0 * d).  y == 1, so it is a ones-row matmul
        # (MXU does the N reduction, VPU/XLU stay free for the next channel's work).
        w0 = jnp.exp(d * coef[0:1, 0:1])                           # (tn, tm)
        ones = jnp.ones((1, tn), jnp.float32)
        rows.append(jnp.dot(ones, w0, preferred_element_type=jnp.float32))
        ch0 = 1

    yT = yT_ref[0] if cin > 0 else None                            # (cin, tn)
    for c in range(cin):
        wc = jnp.exp(d * coef[0:1, ch0 + c:ch0 + c + 1])           # (tn, tm)
        yc = yT[c:c + 1, :]                                        # (1, tn) lane-dense
        # N-reduction on the MXU: (1, tn) @ (tn, tm) -> (1, tm)
        rows.append(jnp.dot(yc, wc, preferred_element_type=jnp.float32))

    for i, r in enumerate(rows):
        acc_ref[i:i + 1, :] += r

    @pl.when(k == pl.num_programs(2) - 1)
    def _finalize():
        acc = acc_ref[...]                                         # (C, tm)
        if use_density and use_density_norm:
            dens = acc[0:1, :]                                     # (1, tm)
            # One reciprocal row + broadcast multiply instead of C divides.
            # (approx=True uses the cheap EUP vrcp; kept exact here for tight testing.)
            inv = pl.reciprocal(dens + 1e-8, approx=False)         # (1, tm)
            normed = acc * inv
            row_id = lax.broadcasted_iota(jnp.int32, acc.shape, 0)
            acc = jnp.where(row_id == 0, acc, normed)
        # Final projection on the MXU, output stays lane-dense on M.
        proj = jnp.dot(wT_ref[...], acc, preferred_element_type=jnp.float32)
        proj = proj + b_ref[...]                                   # (Cout, tm)
        out_ref[0] = proj.astype(out_ref.dtype)


def conv_deep_set(context_in, context_out, target_in, sigma, w_proj, b_proj,
                  *, use_density=True, use_density_norm=True,
                  tile_m=512, tile_n=512,
                  vmem_limit_bytes=32 * 1024 * 1024):
    """Pallas implementation of ConvDeepSet.forward.

    context_in : (B, N, 1), context_out : (B, N, Cin), target_in : (B, M, 1)
    sigma      : (C,) with C = Cin + 1 if use_density else Cin
    w_proj     : (C, Cout)   (== transpose of the PyTorch nn.Linear weight)
    b_proj     : (Cout,)
    returns    : (B, M, Cout)
    """
    if context_in.ndim == 2:
        context_in = context_in[..., None]
    if context_out.ndim == 2:
        context_out = context_out[..., None]
    if target_in.ndim == 2:
        target_in = target_in[..., None]

    context_in = context_in.astype(jnp.float32)
    context_out = context_out.astype(jnp.float32)
    target_in = target_in.astype(jnp.float32)

    B, N, _ = context_in.shape
    M = target_in.shape[1]
    Cin = context_out.shape[-1]
    C = Cin + 1 if use_density else Cin
    Cout = w_proj.shape[-1]
    assert sigma.shape[0] == C, "sigma must have one entry per (density +) input channel"

    # --- tiles: lane dims multiple of 128 (or full extent), sublane dims multiple of 8 ---
    if M > tile_m:
        tm = _round_up(tile_m, 128)
        Mp = _round_up(M, tm)
    else:
        tm, Mp = M, M
    if N > tile_n:
        tn = _round_up(tile_n, 128)
        Np = _round_up(N, tn)
    else:
        tn, Np = N, N

    # Pad the reduction (N) axis with far-away context x so exp(coef * d) underflows to
    # exactly 0 (contributes nothing, including to the density).  Padded M is sliced off.
    BIG = jnp.float32(1e8)
    if Np != N:
        context_in = jnp.concatenate(
            [context_in, jnp.full((B, Np - N, 1), BIG, jnp.float32)], axis=1)
        context_out = jnp.concatenate(
            [context_out, jnp.zeros((B, Np - N, Cin), jnp.float32)], axis=1)
    if Mp != M:
        target_in = jnp.concatenate(
            [target_in, jnp.zeros((B, Mp - M, 1), jnp.float32)], axis=1)

    tx = jnp.transpose(target_in, (0, 2, 1))            # (B, 1, Mp)  M lane-dense
    yT = jnp.transpose(context_out, (0, 2, 1))          # (B, Cin, Np) N lane-dense

    scales = jnp.exp(sigma.astype(jnp.float32))          # (C,)
    coef = (-0.5 / (scales ** 2)).reshape(1, C)          # (1, C)
    wT = jnp.transpose(w_proj.astype(jnp.float32))       # (Cout, C)
    b2 = b_proj.astype(jnp.float32).reshape(Cout, 1)     # (Cout, 1)

    kernel = functools.partial(
        _conv_deep_set_kernel,
        cin=Cin,
        use_density=bool(use_density),
        use_density_norm=bool(use_density_norm),
    )

    grid = (B, Mp // tm, Np // tn)

    grid_spec = pltpu.PrefetchScalarGridSpec(
        num_scalar_prefetch=0,
        grid=grid,
        in_specs=[
            pl.BlockSpec((1, tn, 1), lambda b, m, k: (b, k, 0)),      # context x
            pl.BlockSpec((1, 1, tm), lambda b, m, k: (b, 0, m)),      # target x (transposed)
            pl.BlockSpec((1, Cin, tn), lambda b, m, k: (b, 0, k)),    # context y (channel-major)
            pl.BlockSpec((1, C), lambda b, m, k: (0, 0)),             # RBF coefficients
            pl.BlockSpec((Cout, C), lambda b, m, k: (0, 0)),          # projection weight^T
            pl.BlockSpec((Cout, 1), lambda b, m, k: (0, 0)),          # projection bias
        ],
        out_specs=pl.BlockSpec((1, Cout, tm), lambda b, m, k: (b, 0, m)),
        scratch_shapes=[pltpu.VMEM((C, tm), jnp.float32)],            # N-axis accumulator
    )

    out = pl.pallas_call(
        kernel,
        out_shape=jax.ShapeDtypeStruct((B, Cout, Mp), jnp.float32),
        grid_spec=grid_spec,
        compiler_params=pltpu.CompilerParams(
            dimension_semantics=("parallel", "parallel", "arbitrary"),
            vmem_limit_bytes=vmem_limit_bytes,
        ),
    )(context_in, tx, yT, coef, wT, b2)

    # Back to the module's (B, M, Cout) layout; drop the M padding.
    return jnp.transpose(out[:, :, :M], (0, 2, 1))


def _reference(context_in, context_out, target_in, sigma, w_proj, b_proj):
    """Pure-JAX transliteration of the PyTorch forward (defaults: density + norm)."""
    B, N, _ = context_in.shape
    dists = jnp.sum((context_in[:, :, None, :] - target_in[:, None, :, :]) ** 2, -1)  # (B,N,M)
    scales = jnp.exp(sigma)
    weights = jnp.exp(-0.5 * dists[..., None] / scales ** 2)                          # (B,N,M,C)
    density = jnp.ones((B, N, 1), context_out.dtype)
    ctx = jnp.concatenate([density, context_out], axis=2)                             # (B,N,C)
    out = jnp.sum(ctx[:, :, None, :] * weights, axis=1)                               # (B,M,C)
    dens, conv = out[..., :1], out[..., 1:]
    conv = conv / (dens + 1e-8)
    out = jnp.concatenate([dens, conv], axis=-1)
    proj = jnp.einsum("bmc,co->bmo", out, w_proj, precision=jax.lax.Precision.HIGHEST)
    return proj + b_proj[None, None, :]


if __name__ == "__main__":
    # Parameters (deterministic, matching the PyTorch __init__ / custom_init):
    #   sigma = log(init_length_scale) * ones(C)
    #   projection: nn.Linear(C, Cout); xavier_normal_(gain=1.0) weight, bias = 0.0
    Cin, Cout = 4, 8
    C = Cin + 1                       # density channel
    init_length_scale = 0.1

    key = jax.random.PRNGKey(0)
    k1, k2, k3, k4 = jax.random.split(key, 4)
    sigma = jnp.log(init_length_scale) * jnp.ones((C,), dtype=jnp.float32)
    xavier_std = (2.0 / (C + Cout)) ** 0.5
    w_proj = jax.random.normal(k4, (C, Cout), dtype=jnp.float32) * xavier_std
    b_proj = jnp.zeros((Cout,), dtype=jnp.float32)

    # --- test 1: small shapes, single tile per axis ---
    B, N, M = 2, 8, 16
    context_in = jax.random.normal(k1, (B, N, 1), dtype=jnp.float32)
    context_out = jax.random.normal(k2, (B, N, Cin), dtype=jnp.float32)
    target_in = jax.random.normal(k3, (B, M, 1), dtype=jnp.float32)

    out = conv_deep_set(context_in, context_out, target_in, sigma, w_proj, b_proj)
    out = jax.block_until_ready(out)
    ref = _reference(context_in, context_out, target_in, sigma, w_proj, b_proj)
    assert out.shape == (B, M, Cout)
    err = jnp.max(jnp.abs(out - ref))
    assert jnp.allclose(out, ref, atol=1e-3, rtol=1e-3), f"max abs err {err}"

    # --- test 2: exercises M/N tiling, N-axis accumulation and padding ---
    B2, N2, M2 = 2, 300, 260
    kk1, kk2, kk3 = jax.random.split(jax.random.PRNGKey(1), 3)
    ci2 = jax.random.normal(kk1, (B2, N2, 1), dtype=jnp.float32)
    co2 = jax.random.normal(kk2, (B2, N2, Cin), dtype=jnp.float32)
    ti2 = jax.random.normal(kk3, (B2, M2, 1), dtype=jnp.float32)

    out2 = conv_deep_set(ci2, co2, ti2, sigma, w_proj, b_proj,
                         tile_m=128, tile_n=128)
    out2 = jax.block_until_ready(out2)
    ref2 = _reference(ci2, co2, ti2, sigma, w_proj, b_proj)
    assert out2.shape == (B2, M2, Cout)
    err2 = jnp.max(jnp.abs(out2 - ref2))
    assert jnp.allclose(out2, ref2, atol=1e-3, rtol=1e-3), f"max abs err {err2}"

    print("KERNEL_OK")
</pallas_src>

<mosaic_0001>
module attributes {stable_mosaic.version = 11 : i64} {
  func.func @_conv_deep_set_kernel(%arg0: i32, %arg1: i32, %arg2: i32, %arg3: memref<1x8x1xf32, #tpu.memory_space<vmem>>, %arg4: memref<1x1x16xf32, #tpu.memory_space<vmem>>, %arg5: memref<1x4x8xf32, #tpu.memory_space<vmem>>, %arg6: memref<1x5xf32, #tpu.memory_space<vmem>>, %arg7: memref<8x5xf32, #tpu.memory_space<vmem>>, %arg8: memref<8x1xf32, #tpu.memory_space<vmem>>, %arg9: memref<1x8x16xf32, #tpu.memory_space<vmem>>, %arg10: memref<5x16xf32, #tpu.memory_space<vmem>>) attributes {dimension_semantics = [#tpu.dimension_semantics<parallel>, #tpu.dimension_semantics<parallel>, #tpu.dimension_semantics<arbitrary>], iteration_bounds = array<i64: 2, 1, 1>, scalar_prefetch = 0 : i64, scratch_operands = 1 : i64, tpu.core_type = #tpu.core_type<tc>, window_params = [{transform_indices = @transform_0, window_bounds = array<i64: 1, 8, 1>}, {transform_indices = @transform_1, window_bounds = array<i64: 1, 1, 16>}, {transform_indices = @transform_2, window_bounds = array<i64: 1, 4, 8>}, {pipeline_mode = #tpu.pipeline_mode<synchronous>, transform_indices = @transform_3, window_bounds = array<i64: 1, 5>}, {pipeline_mode = #tpu.pipeline_mode<synchronous>, transform_indices = @transform_4, window_bounds = array<i64: 8, 5>}, {pipeline_mode = #tpu.pipeline_mode<synchronous>, transform_indices = @transform_5, window_bounds = array<i64: 8, 1>}, {transform_indices = @transform_6, window_bounds = array<i64: 1, 8, 16>}]} {
    %c0_i32 = arith.constant 0 : i32
    %0 = arith.cmpi eq, %arg2, %c0_i32 : i32
    %1 = arith.extui %0 : i1 to i32
    %c0_i32_0 = arith.constant 0 : i32
    %2 = arith.cmpi ne, %1, %c0_i32_0 : i32
    scf.if %2 {
      %cst_34 = arith.constant 0.000000e+00 : f32
      %62 = vector.broadcast %cst_34 : f32 to vector<5x16xf32>
      %c0_35 = arith.constant 0 : index
      %c0_36 = arith.constant 0 : index
      %63 = vector.load %arg10[%c0_35, %c0_36] : memref<5x16xf32, #tpu.memory_space<vmem>>, vector<5x16xf32>
      tpu.vector_store %arg10[%c0_35, %c0_36], %62 {strides = array<i32>} : memref<5x16xf32, #tpu.memory_space<vmem>>, vector<5x16xf32>,
    } else {
    }
    %c0 = arith.constant 0 : index
    %c0_1 = arith.constant 0 : index
    %c0_2 = arith.constant 0 : index
    %3 = vector.load %arg3[%c0, %c0_1, %c0_2] : memref<1x8x1xf32, #tpu.memory_space<vmem>>, vector<1x8x1xf32>
    %4 = vector.shape_cast %3 : vector<1x8x1xf32> to vector<8x1xf32>
    %c0_3 = arith.constant 0 : index
    %c0_4 = arith.constant 0 : index
    %c0_5 = arith.constant 0 : index
    %5 = vector.load %arg4[%c0_3, %c0_4, %c0_5] : memref<1x1x16xf32, #tpu.memory_space<vmem>>, vector<1x1x16xf32>
    %6 = vector.shape_cast %5 : vector<1x1x16xf32> to vector<1x16xf32>
    %7 = vector.broadcast %4 : vector<8x1xf32> to vector<8x16xf32>
    %8 = vector.broadcast %6 : vector<1x16xf32> to vector<8x16xf32>
    %9 = arith.subf %7, %8 : vector<8x16xf32>
    %10 = arith.mulf %9, %9 : vector<8x16xf32>
    %c0_6 = arith.constant 0 : index
    %c0_7 = arith.constant 0 : index
    %11 = vector.load %arg6[%c0_6, %c0_7] : memref<1x5xf32, #tpu.memory_space<vmem>>, vector<1x5xf32>
    %12 = vector.extract_strided_slice %11 {offsets = [0, 0], sizes = [1, 1], strides = [1, 1]} : vector<1x5xf32> to vector<1x1xf32>
    %13 = vector.broadcast %12 : vector<1x1xf32> to vector<8x16xf32>
    %14 = arith.mulf %10, %13 : vector<8x16xf32>
    %15 = math.exp %14 : vector<8x16xf32>
    %cst = arith.constant 1.000000e+00 : f32
    %16 = vector.broadcast %cst : f32 to vector<1x8xf32>
    %cst_8 = arith.constant dense<0.000000e+00> : vector<1x16xf32>
    %17 = tpu.matmul %16, %15, %cst_8 {dimension_numbers = #tpu.dot_dimension_numbers<[1], [0], [0], [1], [0, 0, 1, 1], [], []>} : vector<1x8xf32>, vector<8x16xf32>, vector<1x16xf32> -> vector<1x16xf32>
    %c0_9 = arith.constant 0 : index
    %c0_10 = arith.constant 0 : index
    %c0_11 = arith.constant 0 : index
    %18 = vector.load %arg5[%c0_9, %c0_10, %c0_11] : memref<1x4x8xf32, #tpu.memory_space<vmem>>, vector<1x4x8xf32>
    %19 = vector.shape_cast %18 : vector<1x4x8xf32> to vector<4x8xf32>
    %20 = vector.extract_strided_slice %11 {offsets = [0, 1], sizes = [1, 1], strides = [1, 1]} : vector<1x5xf32> to vector<1x1xf32>
    %21 = vector.broadcast %20 : vector<1x1xf32> to vector<8x16xf32>
    %22 = arith.mulf %10, %21 : vector<8x16xf32>
    %23 = math.exp %22 : vector<8x16xf32>
    %24 = vector.extract_strided_slice %19 {offsets = [0, 0], sizes = [1, 8], strides = [1, 1]} : vector<4x8xf32> to vector<1x8xf32>
    %cst_12 = arith.constant dense<0.000000e+00> : vector<1x16xf32>
    %25 = tpu.matmul %24, %23, %cst_12 {dimension_numbers = #tpu.dot_dimension_numbers<[1], [0], [0], [1], [0, 0, 1, 1], [], []>} : vector<1x8xf32>, vector<8x16xf32>, vector<1x16xf32> -> vector<1x16xf32>
    %26 = vector.extract_strided_slice %11 {offsets = [0, 2], sizes = [1, 1], strides = [1, 1]} : vector<1x5xf32> to vector<1x1xf32>
    %27 = vector.broadcast %26 : vector<1x1xf32> to vector<8x16xf32>
    %28 = arith.mulf %10, %27 : vector<8x16xf32>
    %29 = math.exp %28 : vector<8x16xf32>
    %30 = vector.extract_strided_slice %19 {offsets = [1, 0], sizes = [1, 8], strides = [1, 1]} : vector<4x8xf32> to vector<1x8xf32>
    %cst_13 = arith.constant dense<0.000000e+00> : vector<1x16xf32>
    %31 = tpu.matmul %30, %29, %cst_13 {dimension_numbers = #tpu.dot_dimension_numbers<[1], [0], [0], [1], [0, 0, 1, 1], [], []>} : vector<1x8xf32>, vector<8x16xf32>, vector<1x16xf32> -> vector<1x16xf32>
    %32 = vector.extract_strided_slice %11 {offsets = [0, 3], sizes = [1, 1], strides = [1, 1]} : vector<1x5xf32> to vector<1x1xf32>
    %33 = vector.broadcast %32 : vector<1x1xf32> to vector<8x16xf32>
    %34 = arith.mulf %10, %33 : vector<8x16xf32>
    %35 = math.exp %34 : vector<8x16xf32>
    %36 = vector.extract_strided_slice %19 {offsets = [2, 0], sizes = [1, 8], strides = [1, 1]} : vector<4x8xf32> to vector<1x8xf32>
    %cst_14 = arith.constant dense<0.000000e+00> : vector<1x16xf32>
    %37 = tpu.matmul %36, %35, %cst_14 {dimension_numbers = #tpu.dot_dimension_numbers<[1], [0], [0], [1], [0, 0, 1, 1], [], []>} : vector<1x8xf32>, vector<8x16xf32>, vector<1x16xf32> -> vector<1x16xf32>
    %38 = vector.extract_strided_slice %11 {offsets = [0, 4], sizes = [1, 1], strides = [1, 1]} : vector<1x5xf32> to vector<1x1xf32>
    %39 = vector.broadcast %38 : vector<1x1xf32> to vector<8x16xf32>
    %40 = arith.mulf %10, %39 : vector<8x16xf32>
    %41 = math.exp %40 : vector<8x16xf32>
    %42 = vector.extract_strided_slice %19 {offsets = [3, 0], sizes = [1, 8], strides = [1, 1]} : vector<4x8xf32> to vector<1x8xf32>
    %cst_15 = arith.constant dense<0.000000e+00> : vector<1x16xf32>
    %43 = tpu.matmul %42, %41, %cst_15 {dimension_numbers = #tpu.dot_dimension_numbers<[1], [0], [0], [1], [0, 0, 1, 1], [], []>} : vector<1x8xf32>, vector<8x16xf32>, vector<1x16xf32> -> vector<1x16xf32>
    %c0_16 = arith.constant 0 : index
    %c0_17 = arith.constant 0 : index
    %44 = vector.load %arg10[%c0_16, %c0_17] : memref<5x16xf32, #tpu.memory_space<vmem>>, vector<1x16xf32>
    %45 = arith.addf %44, %17 : vector<1x16xf32>
    %c0_18 = arith.constant 0 : index
    %c0_19 = arith.constant 0 : index
    %46 = vector.load %arg10[%c0_18, %c0_19] : memref<5x16xf32, #tpu.memory_space<vmem>>, vector<1x16xf32>
    tpu.vector_store %arg10[%c0_18, %c0_19], %45 {strides = array<i32>} : memref<5x16xf32, #tpu.memory_space<vmem>>, vector<1x16xf32>,
    %c1 = arith.constant 1 : index
    %c0_20 = arith.constant 0 : index
    %47 = vector.load %arg10[%c1, %c0_20] : memref<5x16xf32, #tpu.memory_space<vmem>>, vector<1x16xf32>
    %48 = arith.addf %47, %25 : vector<1x16xf32>
    %c1_21 = arith.constant 1 : index
    %c0_22 = arith.constant 0 : index
    %49 = vector.load %arg10[%c1_21, %c0_22] : memref<5x16xf32, #tpu.memory_space<vmem>>, vector<1x16xf32>
    tpu.vector_store %arg10[%c1_21, %c0_22], %48 {strides = array<i32>} : memref<5x16xf32, #tpu.memory_space<vmem>>, vector<1x16xf32>,
    %c2 = arith.constant 2 : index
    %c0_23 = arith.constant 0 : index
    %50 = vector.load %arg10[%c2, %c0_23] : memref<5x16xf32, #tpu.memory_space<vmem>>, vector<1x16xf32>
    %51 = arith.addf %50, %31 : vector<1x16xf32>
    %c2_24 = arith.constant 2 : index
    %c0_25 = arith.constant 0 : index
    %52 = vector.load %arg10[%c2_24, %c0_25] : memref<5x16xf32, #tpu.memory_space<vmem>>, vector<1x16xf32>
    tpu.vector_store %arg10[%c2_24, %c0_25], %51 {strides = array<i32>} : memref<5x16xf32, #tpu.memory_space<vmem>>, vector<1x16xf32>,
    %c3 = arith.constant 3 : index
    %c0_26 = arith.constant 0 : index
    %53 = vector.load %arg10[%c3, %c0_26] : memref<5x16xf32, #tpu.memory_space<vmem>>, vector<1x16xf32>
    %54 = arith.addf %53, %37 : vector<1x16xf32>
    %c3_27 = arith.constant 3 : index
    %c0_28 = arith.constant 0 : index
    %55 = vector.load %arg10[%c3_27, %c0_28] : memref<5x16xf32, #tpu.memory_space<vmem>>, vector<1x16xf32>
    tpu.vector_store %arg10[%c3_27, %c0_28], %54 {strides = array<i32>} : memref<5x16xf32, #tpu.memory_space<vmem>>, vector<1x16xf32>,
    %c4 = arith.constant 4 : index
    %c0_29 = arith.constant 0 : index
    %56 = vector.load %arg10[%c4, %c0_29] : memref<5x16xf32, #tpu.memory_space<vmem>>, vector<1x16xf32>
    %57 = arith.addf %56, %43 : vector<1x16xf32>
    %c4_30 = arith.constant 4 : index
    %c0_31 = arith.constant 0 : index
    %58 = vector.load %arg10[%c4_30, %c0_31] : memref<5x16xf32, #tpu.memory_space<vmem>>, vector<1x16xf32>
    tpu.vector_store %arg10[%c4_30, %c0_31], %57 {strides = array<i32>} : memref<5x16xf32, #tpu.memory_space<vmem>>, vector<1x16xf32>,
    %c0_i32_32 = arith.constant 0 : i32
    %59 = arith.cmpi eq, %arg2, %c0_i32_32 : i32
    %60 = arith.extui %59 : i1 to i32
    %c0_i32_33 = arith.constant 0 : i32
    %61 = arith.cmpi ne, %60, %c0_i32_33 : i32
    scf.if %61 {
      %c0_34 = arith.constant 0 : index
      %c0_35 = arith.constant 0 : index
      %62 = vector.load %arg10[%c0_34, %c0_35] : memref<5x16xf32, #tpu.memory_space<vmem>>, vector<5x16xf32>
      %63 = vector.extract_strided_slice %62 {offsets = [0, 0], sizes = [1, 16], strides = [1, 1]} : vector<5x16xf32> to vector<1x16xf32>
      %cst_36 = arith.constant 9.99999993E-9 : f32
      %64 = vector.broadcast %cst_36 : f32 to vector<1x16xf32>
      %65 = arith.addf %63, %64 : vector<1x16xf32>
      %66 = tpu.reciprocal %65 : vector<1x16xf32> -> vector<1x16xf32>
      %67 = vector.broadcast %66 : vector<1x16xf32> to vector<5x16xf32>
      %68 = arith.mulf %62, %67 : vector<5x16xf32>
      %69 = tpu.iota {dimensions = array<i32: 0>} : vector<5x16xi32>
      %c0_i32_37 = arith.constant 0 : i32
      %70 = vector.broadcast %c0_i32_37 : i32 to vector<5x16xi32>
      %71 = arith.cmpi eq, %69, %70 : vector<5x16xi32>
      %72 = arith.select %71, %62, %68 : vector<5x16xi1>, vector<5x16xf32>
      %c0_38 = arith.constant 0 : index
      %c0_39 = arith.constant 0 : index
      %73 = vector.load %arg7[%c0_38, %c0_39] : memref<8x5xf32, #tpu.memory_space<vmem>>, vector<8x5xf32>
      %cst_40 = arith.constant dense<0.000000e+00> : vector<8x16xf32>
      %74 = tpu.matmul %73, %72, %cst_40 {dimension_numbers = #tpu.dot_dimension_numbers<[1], [0], [0], [1], [0, 0, 1, 1], [], []>} : vector<8x5xf32>, vector<5x16xf32>, vector<8x16xf32> -> vector<8x16xf32>
      %c0_41 = arith.constant 0 : index
      %c0_42 = arith.constant 0 : index
      %75 = vector.load %arg8[%c0_41, %c0_42] : memref<8x1xf32, #tpu.memory_space<vmem>>, vector<8x1xf32>
      %76 = vector.broadcast %75 : vector<8x1xf32> to vector<8x16xf32>
      %77 = arith.addf %74, %76 : vector<8x16xf32>
      %c0_43 = arith.constant 0 : index
      %c0_44 = arith.constant 0 : index
      %c0_45 = arith.constant 0 : index
      %78 = vector.load %arg9[%c0_43, %c0_44, %c0_45] : memref<1x8x16xf32, #tpu.memory_space<vmem>>, vector<1x8x16xf32>
      %79 = vector.shape_cast %78 : vector<1x8x16xf32> to vector<8x16xf32>
      %80 = vector.shape_cast %77 : vector<8x16xf32> to vector<1x8x16xf32>
      tpu.vector_store %arg9[%c0_43, %c0_44, %c0_45], %80 {strides = array<i32>} : memref<1x8x16xf32, #tpu.memory_space<vmem>>, vector<1x8x16xf32>,
    } else {
    }
    return
  }
  func.func @transform_0(%arg0: i32, %arg1: i32, %arg2: i32) -> (i32, i32, i32) {
    %c0_i32 = arith.constant 0 : i32
    %c0_i32_0 = arith.constant 0 : i32
    return %arg0, %arg2, %c0_i32 : i32, i32, i32
  }
  func.func @transform_1(%arg0: i32, %arg1: i32, %arg2: i32) -> (i32, i32, i32) {
    %c0_i32 = arith.constant 0 : i32
    %c0_i32_0 = arith.constant 0 : i32
    return %arg0, %c0_i32, %arg1 : i32, i32, i32
  }
  func.func @transform_2(%arg0: i32, %arg1: i32, %arg2: i32) -> (i32, i32, i32) {
    %c0_i32 = arith.constant 0 : i32
    %c0_i32_0 = arith.constant 0 : i32
    return %arg0, %c0_i32, %arg2 : i32, i32, i32
  }
  func.func @transform_3(%arg0: i32, %arg1: i32, %arg2: i32) -> (i32, i32) {
    %c0_i32 = arith.constant 0 : i32
    %c0_i32_0 = arith.constant 0 : i32
    %c0_i32_1 = arith.constant 0 : i32
    return %c0_i32, %c0_i32_0 : i32, i32
  }
  func.func @transform_4(%arg0: i32, %arg1: i32, %arg2: i32) -> (i32, i32) {
    %c0_i32 = arith.constant 0 : i32
    %c0_i32_0 = arith.constant 0 : i32
    %c0_i32_1 = arith.constant 0 : i32
    return %c0_i32, %c0_i32_0 : i32, i32
  }
  func.func @transform_5(%arg0: i32, %arg1: i32, %arg2: i32) -> (i32, i32) {
    %c0_i32 = arith.constant 0 : i32
    %c0_i32_0 = arith.constant 0 : i32
    %c0_i32_1 = arith.constant 0 : i32
    return %c0_i32, %c0_i32_0 : i32, i32
  }
  func.func @transform_6(%arg0: i32, %arg1: i32, %arg2: i32) -> (i32, i32, i32) {
    %c0_i32 = arith.constant 0 : i32
    %c0_i32_0 = arith.constant 0 : i32
    return %arg0, %c0_i32, %arg1 : i32, i32, i32
  }
}

</mosaic_0001>

<llo_original>
// kernel: tpu_custom_call.1
$region0: #{tpu_custom_call.1}
  #allocation0 [shape = 'u32[]', space=smem, size = 0x4, offset = 0x4, fixed_abs, tag = 'smem constant byte address 0x4 - core index']
  #allocation1 [shape = 'u32[144,128]{1,0:T(1,128)}', space=vmem, size = 0x12000, scoped, tag = 'internal scratch']
  #allocation2 [shape = 'f32[5,16]{1,0:T(8,128)}', space=vmem, size = 0x1000, scoped, tag = 'scratch operand']
  %s0 = inlined_call_operand.vmem [shape: f32[2,8,1], index: 0, kind: input, shape index: {}]
  %s1 = inlined_call_operand.vmem [shape: f32[2,1,16], index: 1, kind: input, shape index: {}]
  %s2 = inlined_call_operand.vmem [shape: f32[2,4,8], index: 2, kind: input, shape index: {}]
  %s3 = inlined_call_operand.vmem [shape: f32[1,5], index: 3, kind: input, shape index: {}]
  %s4 = inlined_call_operand.vmem [shape: f32[8,5], index: 4, kind: input, shape index: {}]
  %s5 = inlined_call_operand.vmem [shape: f32[8,1], index: 5, kind: input, shape index: {}]
  %s6 = inlined_call_operand.hbm [shape: f32[2,8,16], index: 6, kind: output, shape index: {}]
  %s7 = sld [smem:[#allocation0]]
  $region65: #{tpu_custom_call.1} parent=0
    _
  %s9 = ssub.s32 1, %s7
  %s10 = scalar_select 0, %s9, %s7
  $region1: #{tpu_custom_call.1} parent=0
    #allocation3 [shape = 'u8[8192]{0}', space=vmem, size = 0x2000, scoped, tag = 'output window, operand 0']
    #allocation4 [shape = 's32[2]{0}', space=sflag, size = 0x8, scoped, tag = 'scoped memory for tpu_custom_call.1']
    %11 = vsyncpa [#allocation4], 0
    %s12 = scalar_lea.sflag [#allocation4], 1
    %13 = vsyncpa %s12, 0
    loop: start=0, step=1, limit=4
    $region2: #{tpu_custom_call.1} parent=1 // loop_pre_header
      _
    $region3: #{tpu_custom_call.1} parent=1 // loop_header
      %s15 = sphi 0, %s19
      %p16 = scmp.ge.s32.totalorder %s15, 4
      %s22 = sphi 0, %s41
      %s23 = sphi 0, %s37
      %s24 = sphi 0, %s33
      %s25 = sphi 0, %s22
      %s26 = sphi 0, %s23
      %s27 = sphi 0, %s24
      %s28 = sphi 0, %s25
      %s29 = sphi 0, %s26
      %s30 = sphi 0, %s27
      %s46 = sphi 0, %s48
      %s49 = sphi 0, %s46
      %s50 = sphi 0, %s49
      %s66 = sphi 0, %s50
      %s74 = sphi 0, %s76
      %s77 = sphi 0, %s74
      %s78 = sphi 0, %s77
      %s94 = sphi 0, %s78
      %s102 = sphi 0, %s104
      %s105 = sphi 0, %s102
      %s106 = sphi 0, %s105
      %s122 = sphi 0, %s106
      %s126 = sphi 0, %s126
      %s128 = sphi 0, %s126
      %s129 = sphi 0, %s128
      %s143 = sphi 0, %s129
      %s147 = sphi 0, %s147
      %s149 = sphi 0, %s147
      %s150 = sphi 0, %s149
      %s164 = sphi 0, %s150
      %s168 = sphi 0, %s168
      %s170 = sphi 0, %s168
      %s171 = sphi 0, %s170
      %s185 = sphi 0, %s171
      %s193 = sphi 0, %s195
      %s196 = sphi 0, %s193
      %s197 = sphi 0, %s196
      %s213 = sphi 0, %s197
    $region4: #{tpu_custom_call.1} parent=1 // loop_header_branch
      %18 = sbr.rel (%p16) target = $region8
    $region5: #{tpu_custom_call.1} parent=1 // loop_body
      %s20 = ssub.s32 %s15, 1
      %s21 = ssub.s32 %s15, 2
      %s31 = sadd.s32 1, %s24
      %p32 = scmp.ge.s32.totalorder %s31, 1
      %s33 = scalar_select %p32, 0, %s31
      %s34 = sadd.s32 1, %s23
      %s35 = scalar_select %p32, %s34, %s23
      %p36 = scmp.ge.s32.totalorder %s35, 1
      %s37 = scalar_select %p36, 0, %s35
      %s38 = sadd.s32 1, %s22
      %s39 = scalar_select %p36, %s38, %s22
      %p40 = scmp.ge.s32.totalorder %s39, 2
      %s41 = scalar_select %p40, 0, %s39
      %s42 = ssub.s32 %s22, %s41
      %s43 = ssub.s32 %s24, %s33
      %s44 = sor.u32 %s42, %s43
      %p45 = scmp.eq.s32.totalorder %s44, 0
      %s47 = sadd.s32 %s46, 1
      %s48 = scalar_select %p45, %s46, %s47
      %p51 = pneg %p45
      %p52 = scmp.eq.s32.totalorder %s15, 1
      %p53 = por %p51, %p52
      %p54 = scmp.ne.s32.totalorder %s46, %s49
      %p55 = scmp.eq.s32.totalorder %s15, 0
      %p56 = por %p54, %p55
      %p57 = scmp.ne.s32.totalorder %s46, %s49
      %p58 = scmp.eq.s32.totalorder %s20, 1
      %p59 = por %p57, %p58
      %p60 = scmp.ne.s32.totalorder %s49, %s50
      %p61 = scmp.eq.s32.totalorder %s20, 0
      %p62 = por %p60, %p61
      %p63 = scmp.ne.s32.totalorder %s49, %s50
      %p64 = scmp.eq.s32.totalorder %s21, 1
      %p65 = por %p63, %p64
      %p67 = scmp.ne.s32.totalorder %s50, %s66
      %p68 = scmp.eq.s32.totalorder %s21, 0
      %p69 = por %p67, %p68
      %s70 = ssub.s32 %s22, %s41
      %s71 = ssub.s32 %s23, %s37
      %s72 = sor.u32 %s70, %s71
      %p73 = scmp.eq.s32.totalorder %s72, 0
      %s75 = sadd.s32 %s74, 1
      %s76 = scalar_select %p73, %s74, %s75
      %p79 = pneg %p73
      %p80 = scmp.eq.s32.totalorder %s15, 1
      %p81 = por %p79, %p80
      %p82 = scmp.ne.s32.totalorder %s74, %s77
      %p83 = scmp.eq.s32.totalorder %s15, 0
      %p84 = por %p82, %p83
      %p85 = scmp.ne.s32.totalorder %s74, %s77
      %p86 = scmp.eq.s32.totalorder %s20, 1
      %p87 = por %p85, %p86
      %p88 = scmp.ne.s32.totalorder %s77, %s78
      %p89 = scmp.eq.s32.totalorder %s20, 0
      %p90 = por %p88, %p89
      %p91 = scmp.ne.s32.totalorder %s77, %s78
      %p92 = scmp.eq.s32.totalorder %s21, 1
      %p93 = por %p91, %p92
      %p95 = scmp.ne.s32.totalorder %s78, %s94
      %p96 = scmp.eq.s32.totalorder %s21, 0
      %p97 = por %p95, %p96
      %s98 = ssub.s32 %s22, %s41
      %s99 = ssub.s32 %s24, %s33
      %s100 = sor.u32 %s98, %s99
      %p101 = scmp.eq.s32.totalorder %s100, 0
      %s103 = sadd.s32 %s102, 1
      %s104 = scalar_select %p101, %s102, %s103
      %p107 = pneg %p101
      %p108 = scmp.eq.s32.totalorder %s15, 1
      %p109 = por %p107, %p108
      %p110 = scmp.ne.s32.totalorder %s102, %s105
      %p111 = scmp.eq.s32.totalorder %s15, 0
      %p112 = por %p110, %p111
      %p113 = scmp.ne.s32.totalorder %s102, %s105
      %p114 = scmp.eq.s32.totalorder %s20, 1
      %p115 = por %p113, %p114
      %p116 = scmp.ne.s32.totalorder %s105, %s106
      %p117 = scmp.eq.s32.totalorder %s20, 0
      %p118 = por %p116, %p117
      %p119 = scmp.ne.s32.totalorder %s105, %s106
      %p120 = scmp.eq.s32.totalorder %s21, 1
      %p121 = por %p119, %p120
      %p123 = scmp.ne.s32.totalorder %s106, %s122
      %p124 = scmp.eq.s32.totalorder %s21, 0
      %p125 = por %p123, %p124
      %s127 = sadd.s32 %s126, 1
      %p130 = scmp.eq.s32.totalorder %s15, 1
      %p131 = scmp.ne.s32.totalorder %s126, %s128
      %p132 = scmp.eq.s32.totalorder %s15, 0
      %p133 = por %p131, %p132
      %p134 = scmp.ne.s32.totalorder %s126, %s128
      %p135 = scmp.eq.s32.totalorder %s20, 1
      %p136 = por %p134, %p135
      %p137 = scmp.ne.s32.totalorder %s128, %s129
      %p138 = scmp.eq.s32.totalorder %s20, 0
      %p139 = por %p137, %p138
      %p140 = scmp.ne.s32.totalorder %s128, %s129
      %p141 = scmp.eq.s32.totalorder %s21, 1
      %p142 = por %p140, %p141
      %p144 = scmp.ne.s32.totalorder %s129, %s143
      %p145 = scmp.eq.s32.totalorder %s21, 0
      %p146 = por %p144, %p145
      %s148 = sadd.s32 %s147, 1
      %p151 = scmp.eq.s32.totalorder %s15, 1
      %p152 = scmp.ne.s32.totalorder %s147, %s149
      %p153 = scmp.eq.s32.totalorder %s15, 0
      %p154 = por %p152, %p153
      %p155 = scmp.ne.s32.totalorder %s147, %s149
      %p156 = scmp.eq.s32.totalorder %s20, 1
      %p157 = por %p155, %p156
      %p158 = scmp.ne.s32.totalorder %s149, %s150
      %p159 = scmp.eq.s32.totalorder %s20, 0
      %p160 = por %p158, %p159
      %p161 = scmp.ne.s32.totalorder %s149, %s150
      %p162 = scmp.eq.s32.totalorder %s21, 1
      %p163 = por %p161, %p162
      %p165 = scmp.ne.s32.totalorder %s150, %s164
      %p166 = scmp.eq.s32.totalorder %s21, 0
      %p167 = por %p165, %p166
      %s169 = sadd.s32 %s168, 1
      %p172 = scmp.eq.s32.totalorder %s15, 1
      %p173 = scmp.ne.s32.totalorder %s168, %s170
      %p174 = scmp.eq.s32.totalorder %s15, 0
      %p175 = por %p173, %p174
      %p176 = scmp.ne.s32.totalorder %s168, %s170
      %p177 = scmp.eq.s32.totalorder %s20, 1
      %p178 = por %p176, %p177
      %p179 = scmp.ne.s32.totalorder %s170, %s171
      %p180 = scmp.eq.s32.totalorder %s20, 0
      %p181 = por %p179, %p180
      %p182 = scmp.ne.s32.totalorder %s170, %s171
      %p183 = scmp.eq.s32.totalorder %s21, 1
      %p184 = por %p182, %p183
      %p186 = scmp.ne.s32.totalorder %s171, %s185
      %p187 = scmp.eq.s32.totalorder %s21, 0
      %p188 = por %p186, %p187
      %s189 = ssub.s32 %s22, %s41
      %s190 = ssub.s32 %s23, %s37
      %s191 = sor.u32 %s189, %s190
      %p192 = scmp.eq.s32.totalorder %s191, 0
      %s194 = sadd.s32 %s193, 1
      %s195 = scalar_select %p192, %s193, %s194
      %p198 = pneg %p192
      %p199 = scmp.eq.s32.totalorder %s15, 1
      %p200 = por %p198, %p199
      %p201 = scmp.ne.s32.totalorder %s193, %s196
      %p202 = scmp.eq.s32.totalorder %s15, 0
      %p203 = por %p201, %p202
      %p204 = scmp.ne.s32.totalorder %s193, %s196
      %p205 = scmp.eq.s32.totalorder %s20, 1
      %p206 = por %p204, %p205
      %p207 = scmp.ne.s32.totalorder %s196, %s197
      %p208 = scmp.eq.s32.totalorder %s20, 0
      %p209 = por %p207, %p208
      %p210 = scmp.ne.s32.totalorder %s196, %s197
      %p211 = scmp.eq.s32.totalorder %s21, 1
      %p212 = por %p210, %p211
      %p214 = scmp.ne.s32.totalorder %s197, %s213
      %p215 = scmp.eq.s32.totalorder %s21, 0
      %p216 = por %p214, %p215
      %p217 = scmp.le.s32.totalorder 1, %s15
      %p218 = scmp.lt.s32.totalorder %s15, 3
      %p219 = pnand %p217, %p218
      %p220 = pneg %p219
      // Predicated region
      $region9: #{tpu_custom_call.1} parent=5 // pred_check
        _
      $region10: #{tpu_custom_call.1} parent=5 // pred_check_branch
        %222 = sbr.rel (%p219) target = $region12
      $region11: #{tpu_custom_call.1} parent=5 // pred_region
        %s223 = ssub.s32 %s15, 1
        // Predicated region
        $region13: #{tpu_custom_call.1} parent=11 // pred_check
          %p224 = pneg %p139
        $region14: #{tpu_custom_call.1} parent=11 // pred_check_branch
          %226 = sbr.rel (%p224) target = $region16
        $region15: #{tpu_custom_call.1} parent=11 // pred_region
          _
        $region16: #{tpu_custom_call.1} parent=11 // pred_fallthru
          _
        // Predicated region
        $region17: #{tpu_custom_call.1} parent=11 // pred_check
          %p227 = pneg %p160
        $region18: #{tpu_custom_call.1} parent=11 // pred_check_branch
          %229 = sbr.rel (%p227) target = $region20
        $region19: #{tpu_custom_call.1} parent=11 // pred_region
          _
        $region20: #{tpu_custom_call.1} parent=11 // pred_fallthru
          _
        // Predicated region
        $region21: #{tpu_custom_call.1} parent=11 // pred_check
          %p230 = pneg %p181
        $region22: #{tpu_custom_call.1} parent=11 // pred_check_branch
          %232 = sbr.rel (%p230) target = $region24
        $region23: #{tpu_custom_call.1} parent=11 // pred_region
          _
        $region24: #{tpu_custom_call.1} parent=11 // pred_fallthru
          _
      $region12: #{tpu_custom_call.1} parent=5 // pred_fallthru
        _
      %p233 = scmp.lt.s32.totalorder %s15, 2
      // Predicated region
      $region25: #{tpu_custom_call.1} parent=5 // pred_check
        %p234 = pneg %p233
      $region26: #{tpu_custom_call.1} parent=5 // pred_check_branch
        %236 = sbr.rel (%p234) target = $region28
      $region27: #{tpu_custom_call.1} parent=5 // pred_region
        // Predicated region
        $region29: #{tpu_custom_call.1} parent=27 // pred_check
          %p237 = pneg %p56
        $region30: #{tpu_custom_call.1} parent=27 // pred_check_branch
          %239 = sbr.rel (%p237) target = $region32
        $region31: #{tpu_custom_call.1} parent=27 // pred_region
          %p240 = scmp.lt.s32.totalorder %s22, 1
          %s241 = scalar_select %p240, %s22, 1
          %p242 = scmp.lt.s32.totalorder %s24, 0
          %s243 = scalar_select %p242, %s24, 0
          %s244 = sadd.s32 %s243, %s241
          %s245 = smul.addr %s244, 8
          %s246 = scalar_lea.vmem %s0, %s245
        $region32: #{tpu_custom_call.1} parent=27 // pred_fallthru
          _
        // Predicated region
        $region33: #{tpu_custom_call.1} parent=27 // pred_check
          %p247 = pneg %p84
        $region34: #{tpu_custom_call.1} parent=27 // pred_check_branch
          %249 = sbr.rel (%p247) target = $region36
        $region35: #{tpu_custom_call.1} parent=27 // pred_region
          %p250 = scmp.lt.s32.totalorder %s22, 1
          %s251 = scalar_select %p250, %s22, 1
          %p252 = scmp.lt.s32.totalorder %s23, 0
          %s253 = scalar_select %p252, %s23, 0
          %s254 = sadd.s32 %s253, %s251
          %s255 = scalar_lea.vmem %s1, %s254
        $region36: #{tpu_custom_call.1} parent=27 // pred_fallthru
          _
        // Predicated region
        $region37: #{tpu_custom_call.1} parent=27 // pred_check
          %p256 = pneg %p112
        $region38: #{tpu_custom_call.1} parent=27 // pred_check_branch
          %258 = sbr.rel (%p256) target = $region40
        $region39: #{tpu_custom_call.1} parent=27 // pred_region
          %p259 = scmp.lt.s32.totalorder %s22, 1
          %s260 = scalar_select %p259, %s22, 1
          %p261 = scmp.lt.s32.totalorder %s24, 0
          %s262 = scalar_select %p261, %s24, 0
          %s263 = sadd.s32 %s262, %s260
          %s264 = smul.addr %s263, 4
          %s265 = scalar_lea.vmem %s2, %s264
        $region40: #{tpu_custom_call.1} parent=27 // pred_fallthru
          _
      $region28: #{tpu_custom_call.1} parent=5 // pred_fallthru
        _
      %p266 = scmp.le.s32.totalorder 1, %s15
      %p267 = scmp.lt.s32.totalorder %s15, 3
      %p268 = pnand %p266, %p267
      %p269 = pneg %p268
      // Predicated region
      $region41: #{tpu_custom_call.1} parent=5 // pred_check
        _
      $region42: #{tpu_custom_call.1} parent=5 // pred_check_branch
        %271 = sbr.rel (%p268) target = $region44
      $region43: #{tpu_custom_call.1} parent=5 // pred_region
        %s272 = ssub.s32 %s15, 1
        %p273 = scmp.lt.s32.totalorder %s25, 1
        %s274 = scalar_select %p273, %s25, 1
        %p275 = scmp.lt.s32.totalorder %s27, 0
        %s276 = scalar_select %p275, %s27, 0
        %s277 = sadd.s32 %s276, %s274
        %s278 = smul.addr %s277, 8
        %s279 = scalar_lea.vmem %s0, %s278
        %p280 = pneg %p62
        %p281 = pneg %p59
        %p282 = scmp.lt.s32.totalorder %s25, 1
        %s283 = scalar_select %p282, %s25, 1
        %p284 = scmp.lt.s32.totalorder %s26, 0
        %s285 = scalar_select %p284, %s26, 0
        %s286 = sadd.s32 %s285, %s283
        %s287 = scalar_lea.vmem %s1, %s286
        %p288 = pneg %p90
        %p289 = pneg %p87
        %p290 = scmp.lt.s32.totalorder %s25, 1
        %s291 = scalar_select %p290, %s25, 1
        %p292 = scmp.lt.s32.totalorder %s27, 0
        %s293 = scalar_select %p292, %s27, 0
        %s294 = sadd.s32 %s293, %s291
        %s295 = smul.addr %s294, 4
        %s296 = scalar_lea.vmem %s2, %s295
        %p297 = pneg %p118
        %p298 = pneg %p115
        %p299 = pneg %p139
        %p300 = pneg %p136
        %p301 = pneg %p160
        %p302 = pneg %p157
        %p303 = pneg %p181
        %p304 = pneg %p178
        %p305 = pneg %p209
        %p306 = pneg %p206
        %s307 = sand.u32 %s196, 1
        %s308 = scalar_lea.sflag [#allocation4], %s307
        %s309 = sand.u32 %s196, 1
        %s310 = smul.addr %s309, 8
        %s311 = scalar_lea.vmem [#allocation3], %s310
        %p312 = scmp.lt.s32.totalorder %s25, 1
        %s313 = scalar_select %p312, %s25, 1
        %p314 = scmp.lt.s32.totalorder %s27, 0
        %s315 = scalar_select %p314, %s27, 0
        %s316 = sadd.s32 %s315, %s313
        %s317 = smul.addr %s316, 8
        %s318 = scalar_lea.vmem %s0, %s317
        %p319 = scmp.lt.s32.totalorder %s25, 1
        %s320 = scalar_select %p319, %s25, 1
        %p321 = scmp.lt.s32.totalorder %s26, 0
        %s322 = scalar_select %p321, %s26, 0
        %s323 = sadd.s32 %s322, %s320
        %s324 = scalar_lea.vmem %s1, %s323
        %p325 = scmp.lt.s32.totalorder %s25, 1
        %s326 = scalar_select %p325, %s25, 1
        %p327 = scmp.lt.s32.totalorder %s27, 0
        %s328 = scalar_select %p327, %s27, 0
        %s329 = sadd.s32 %s328, %s326
        %s330 = smul.addr %s329, 4
        %s331 = scalar_lea.vmem %s2, %s330
        %p332 = scmp.eq.s32.totalorder %s27, 0
        // Predicated region
        $region45: #{tpu_custom_call.1} parent=43 // pred_check
          %p333 = pneg %p332
        $region46: #{tpu_custom_call.1} parent=43 // pred_check_branch
          %335 = sbr.rel (%p333) target = $region48
        $region47: #{tpu_custom_call.1} parent=43 // pred_region
          %vm336 = vcmask 126976
          %337 = vst.msk [vmem:[#allocation2] sm:$0x1f] %vm336, 0.0
        $region48: #{tpu_custom_call.1} parent=43 // pred_fallthru
          _
        %v338 = vld [vmem:[%s318] sm:$0xff]
        %v339 = vld [vmem:[%s324] sm:$0x1]
        %341 = vset.pattern.permute.xlu0 0
        %342 = vperm.xlu0 %341, %v338
        %v343 = vpop.permute.xlu0 %342
        %v346 = vlaneseq
        %v347 = vshrl.u32 %v346, 7
        %v348 = vsub.s32 0, %v347
        %v349 = vrot.slane %v339, %v348
        %v351 = vsub.f32 %v343, %v349
        %v352 = vmul.f32 %v351, %v351
        %v353 = vld [vmem:[%s3] sm:$0x1]
        %v355 = vlaneseq
        %v356 = vshrl.u32 %v355, 7
        %v357 = vsub.s32 0, %v356
        %v358 = vrot.slane %v353, %v357
        %359 = vset.pattern.permute.xlu0 0
        %360 = vperm.xlu0 %359, %v358
        %v361 = vpop.permute.xlu0 %360
        %v363 = vmul.f32 %v352, %v361
        %v364 = vmul.f32 %v363, 1.442695
        %v365 = vpow.pop %v364
        %vm366 = vcmask 64512
        %v368 = vsel %vm366, 1.0, 0
        %370 = vmatprep.subr.mxu0 0.0
        %371 = vmatpush1.msra.mxu0 0.0
        %372 = vmatprep.subr.mxu0 0.0
        %373 = vmatpush1.msra.mxu0 0.0
        %374 = vmatprep.subr.mxu0 0.0
        %375 = vmatpush1.msra.mxu0 0.0
        %376 = vmatprep.subr.mxu0 0.0
        %377 = vmatpush1.msra.mxu0 0.0
        %378 = vmatprep.subr.mxu0 0.0
        %379 = vmatpush1.msra.mxu0 0.0
        %380 = vmatprep.subr.mxu0 0.0
        %381 = vmatpush1.msra.mxu0 0.0
        %382 = vmatprep.subr.mxu0 0.0
        %383 = vmatpush1.msra.mxu0 0.0
        %384 = vmatprep.subr.mxu0 0.0
        %385 = vmatpush1.msra.mxu0 0.0
        %386 = vmatprep.subr.mxu0 0.0
        %387 = vmatpush1.msra.mxu0 0.0
        %388 = vmatprep.subr.mxu0 0.0
        %389 = vmatpush1.msra.mxu0 0.0
        %390 = vmatprep.subr.mxu0 0.0
        %391 = vmatpush1.msra.mxu0 0.0
        %392 = vmatprep.subr.mxu0 0.0
        %393 = vmatpush1.msra.mxu0 0.0
        %394 = vmatprep.subr.mxu0 0.0
        %395 = vmatpush1.msra.mxu0 0.0
        %396 = vmatprep.subr.mxu0 0.0
        %397 = vmatpush1.msra.mxu0 0.0
        %398 = vmatprep.subr.mxu0 0.0
        %399 = vmatpush1.msra.mxu0 0.0
        %400 = vmatprep.subr.mxu0 0.0
        %401 = vmatpush1.msra.mxu0 %v365
        %402 = vmatprep.subr.mxu0 0.0
        %403 = vmatpush2.msra.mxu0 0.0
        %404 = vmatprep.subr.mxu0 0.0
        %405 = vmatpush2.msra.mxu0 0.0
        %406 = vmatprep.subr.mxu0 0.0
        %407 = vmatpush2.msra.mxu0 0.0
        %408 = vmatprep.subr.mxu0 0.0
        %409 = vmatpush2.msra.mxu0 0.0
        %410 = vmatprep.subr.mxu0 0.0
        %411 = vmatpush2.msra.mxu0 0.0
        %412 = vmatprep.subr.mxu0 0.0
        %413 = vmatpush2.msra.mxu0 0.0
        %414 = vmatprep.subr.mxu0 0.0
        %415 = vmatpush2.msra.mxu0 0.0
        %416 = vmatprep.subr.mxu0 0.0
        %417 = vmatpush2.msra.mxu0 0.0
        %418 = vmatprep.subr.mxu0 0.0
        %419 = vmatpush2.msra.mxu0 0.0
        %420 = vmatprep.subr.mxu0 0.0
        %421 = vmatpush2.msra.mxu0 0.0
        %422 = vmatprep.subr.mxu0 0.0
        %423 = vmatpush2.msra.mxu0 0.0
        %424 = vmatprep.subr.mxu0 0.0
        %425 = vmatpush2.msra.mxu0 0.0
        %426 = vmatprep.subr.mxu0 0.0
        %427 = vmatpush2.msra.mxu0 0.0
        %428 = vmatprep.subr.mxu0 0.0
        %429 = vmatpush2.msra.mxu0 0.0
        %430 = vmatprep.subr.mxu0 0.0
        %431 = vmatpush2.msra.mxu0 0.0
        %432 = vmatprep.subr.mxu0 0.0
        %433 = vmatpush2.msra.mxu0 0.0
        %434 = vmatprep.mubr.f32.mxu0 0.0
        %435 = vmatmul.mubr.f32.gmra.mxu0 %v368
        %v436 = vpop.f32.mrf.mxu0
        %v437 = vadd.f32 0.0, %v436
        %v438 = vpop.f32.mrf.mxu0
        %439 = vdwg.mxu0
        %v440 = vld [vmem:[%s331] sm:$0xf]
        %441 = vset.pattern.permute.xlu0 1
        %442 = vperm.xlu0 %441, %v358
        %v443 = vpop.permute.xlu0 %442
        %v445 = vmul.f32 %v352, %v443
        %v446 = vmul.f32 %v445, 1.442695
        %v447 = vpow.pop %v446
        %v449 = vsel %vm366, %v440, 0
        %451 = vmatprep.subr.mxu0 0.0
        %452 = vmatpush1.msra.mxu0 0.0
        %453 = vmatprep.subr.mxu0 0.0
        %454 = vmatpush1.msra.mxu0 0.0
        %455 = vmatprep.subr.mxu0 0.0
        %456 = vmatpush1.msra.mxu0 0.0
        %457 = vmatprep.subr.mxu0 0.0
        %458 = vmatpush1.msra.mxu0 0.0
        %459 = vmatprep.subr.mxu0 0.0
        %460 = vmatpush1.msra.mxu0 0.0
        %461 = vmatprep.subr.mxu0 0.0
        %462 = vmatpush1.msra.mxu0 0.0
        %463 = vmatprep.subr.mxu0 0.0
        %464 = vmatpush1.msra.mxu0 0.0
        %465 = vmatprep.subr.mxu0 0.0
        %466 = vmatpush1.msra.mxu0 0.0
        %467 = vmatprep.subr.mxu0 0.0
        %468 = vmatpush1.msra.mxu0 0.0
        %469 = vmatprep.subr.mxu0 0.0
        %470 = vmatpush1.msra.mxu0 0.0
        %471 = vmatprep.subr.mxu0 0.0
        %472 = vmatpush1.msra.mxu0 0.0
        %473 = vmatprep.subr.mxu0 0.0
        %474 = vmatpush1.msra.mxu0 0.0
        %475 = vmatprep.subr.mxu0 0.0
        %476 = vmatpush1.msra.mxu0 0.0
        %477 = vmatprep.subr.mxu0 0.0
        %478 = vmatpush1.msra.mxu0 0.0
        %479 = vmatprep.subr.mxu0 0.0
        %480 = vmatpush1.msra.mxu0 0.0
        %481 = vmatprep.subr.mxu0 0.0
        %482 = vmatpush1.msra.mxu0 %v447
        %483 = vmatprep.subr.mxu0 0.0
        %484 = vmatpush2.msra.mxu0 0.0
        %485 = vmatprep.subr.mxu0 0.0
        %486 = vmatpush2.msra.mxu0 0.0
        %487 = vmatprep.subr.mxu0 0.0
        %488 = vmatpush2.msra.mxu0 0.0
        %489 = vmatprep.subr.mxu0 0.0
        %490 = vmatpush2.msra.mxu0 0.0
        %491 = vmatprep.subr.mxu0 0.0
        %492 = vmatpush2.msra.mxu0 0.0
        %493 = vmatprep.subr.mxu0 0.0
        %494 = vmatpush2.msra.mxu0 0.0
        %495 = vmatprep.subr.mxu0 0.0
        %496 = vmatpush2.msra.mxu0 0.0
        %497 = vmatprep.subr.mxu0 0.0
        %498 = vmatpush2.msra.mxu0 0.0
        %499 = vmatprep.subr.mxu0 0.0
        %500 = vmatpush2.msra.mxu0 0.0
        %501 = vmatprep.subr.mxu0 0.0
        %502 = vmatpush2.msra.mxu0 0.0
        %503 = vmatprep.subr.mxu0 0.0
        %504 = vmatpush2.msra.mxu0 0.0
        %505 = vmatprep.subr.mxu0 0.0
        %506 = vmatpush2.msra.mxu0 0.0
        %507 = vmatprep.subr.mxu0 0.0
        %508 = vmatpush2.msra.mxu0 0.0
        %509 = vmatprep.subr.mxu0 0.0
        %510 = vmatpush2.msra.mxu0 0.0
        %511 = vmatprep.subr.mxu0 0.0
        %512 = vmatpush2.msra.mxu0 0.0
        %513 = vmatprep.subr.mxu0 0.0
        %514 = vmatpush2.msra.mxu0 0.0
        %515 = vmatprep.mubr.f32.mxu0 0.0
        %516 = vmatmul.mubr.f32.gmra.mxu0 %v449
        %v517 = vpop.f32.mrf.mxu0
        %v518 = vadd.f32 0.0, %v517
        %v519 = vpop.f32.mrf.mxu0
        %520 = vdwg.mxu0
        %521 = vset.pattern.permute.xlu0 2
        %522 = vperm.xlu0 %521, %v358
        %v523 = vpop.permute.xlu0 %522
        %v525 = vmul.f32 %v352, %v523
        %v526 = vmul.f32 %v525, 1.442695
        %v527 = vpow.pop %v526
        %v528 = vrot.slane %v440, 1
        %v529 = vsel %vm366, %v528, 0
        %531 = vmatprep.subr.mxu0 0.0
        %532 = vmatpush1.msra.mxu0 0.0
        %533 = vmatprep.subr.mxu0 0.0
        %534 = vmatpush1.msra.mxu0 0.0
        %535 = vmatprep.subr.mxu0 0.0
        %536 = vmatpush1.msra.mxu0 0.0
        %537 = vmatprep.subr.mxu0 0.0
        %538 = vmatpush1.msra.mxu0 0.0
        %539 = vmatprep.subr.mxu0 0.0
        %540 = vmatpush1.msra.mxu0 0.0
        %541 = vmatprep.subr.mxu0 0.0
        %542 = vmatpush1.msra.mxu0 0.0
        %543 = vmatprep.subr.mxu0 0.0
        %544 = vmatpush1.msra.mxu0 0.0
        %545 = vmatprep.subr.mxu0 0.0
        %546 = vmatpush1.msra.mxu0 0.0
        %547 = vmatprep.subr.mxu0 0.0
        %548 = vmatpush1.msra.mxu0 0.0
        %549 = vmatprep.subr.mxu0 0.0
        %550 = vmatpush1.msra.mxu0 0.0
        %551 = vmatprep.subr.mxu0 0.0
        %552 = vmatpush1.msra.mxu0 0.0
        %553 = vmatprep.subr.mxu0 0.0
        %554 = vmatpush1.msra.mxu0 0.0
        %555 = vmatprep.subr.mxu0 0.0
        %556 = vmatpush1.msra.mxu0 0.0
        %557 = vmatprep.subr.mxu0 0.0
        %558 = vmatpush1.msra.mxu0 0.0
        %559 = vmatprep.subr.mxu0 0.0
        %560 = vmatpush1.msra.mxu0 0.0
        %561 = vmatprep.subr.mxu0 0.0
        %562 = vmatpush1.msra.mxu0 %v527
        %563 = vmatprep.subr.mxu0 0.0
        %564 = vmatpush2.msra.mxu0 0.0
        %565 = vmatprep.subr.mxu0 0.0
        %566 = vmatpush2.msra.mxu0 0.0
        %567 = vmatprep.subr.mxu0 0.0
        %568 = vmatpush2.msra.mxu0 0.0
        %569 = vmatprep.subr.mxu0 0.0
        %570 = vmatpush2.msra.mxu0 0.0
        %571 = vmatprep.subr.mxu0 0.0
        %572 = vmatpush2.msra.mxu0 0.0
        %573 = vmatprep.subr.mxu0 0.0
        %574 = vmatpush2.msra.mxu0 0.0
        %575 = vmatprep.subr.mxu0 0.0
        %576 = vmatpush2.msra.mxu0 0.0
        %577 = vmatprep.subr.mxu0 0.0
        %578 = vmatpush2.msra.mxu0 0.0
        %579 = vmatprep.subr.mxu0 0.0
        %580 = vmatpush2.msra.mxu0 0.0
        %581 = vmatprep.subr.mxu0 0.0
        %582 = vmatpush2.msra.mxu0 0.0
        %583 = vmatprep.subr.mxu0 0.0
        %584 = vmatpush2.msra.mxu0 0.0
        %585 = vmatprep.subr.mxu0 0.0
        %586 = vmatpush2.msra.mxu0 0.0
        %587 = vmatprep.subr.mxu0 0.0
        %588 = vmatpush2.msra.mxu0 0.0
        %589 = vmatprep.subr.mxu0 0.0
        %590 = vmatpush2.msra.mxu0 0.0
        %591 = vmatprep.subr.mxu0 0.0
        %592 = vmatpush2.msra.mxu0 0.0
        %593 = vmatprep.subr.mxu0 0.0
        %594 = vmatpush2.msra.mxu0 0.0
        %595 = vmatprep.mubr.f32.mxu0 0.0
        %596 = vmatmul.mubr.f32.gmra.mxu0 %v529
        %v597 = vpop.f32.mrf.mxu0
        %v598 = vadd.f32 0.0, %v597
        %v599 = vpop.f32.mrf.mxu0
        %600 = vdwg.mxu0
        %601 = vset.pattern.permute.xlu0 3
        %602 = vperm.xlu0 %601, %v358
        %v603 = vpop.permute.xlu0 %602
        %v605 = vmul.f32 %v352, %v603
        %v606 = vmul.f32 %v605, 1.442695
        %v607 = vpow.pop %v606
        %v608 = vrot.slane %v440, 2
        %v609 = vsel %vm366, %v608, 0
        %611 = vmatprep.subr.mxu0 0.0
        %612 = vmatpush1.msra.mxu0 0.0
        %613 = vmatprep.subr.mxu0 0.0
        %614 = vmatpush1.msra.mxu0 0.0
        %615 = vmatprep.subr.mxu0 0.0
        %616 = vmatpush1.msra.mxu0 0.0
        %617 = vmatprep.subr.mxu0 0.0
        %618 = vmatpush1.msra.mxu0 0.0
        %619 = vmatprep.subr.mxu0 0.0
        %620 = vmatpush1.msra.mxu0 0.0
        %621 = vmatprep.subr.mxu0 0.0
        %622 = vmatpush1.msra.mxu0 0.0
        %623 = vmatprep.subr.mxu0 0.0
        %624 = vmatpush1.msra.mxu0 0.0
        %625 = vmatprep.subr.mxu0 0.0
        %626 = vmatpush1.msra.mxu0 0.0
        %627 = vmatprep.subr.mxu0 0.0
        %628 = vmatpush1.msra.mxu0 0.0
        %629 = vmatprep.subr.mxu0 0.0
        %630 = vmatpush1.msra.mxu0 0.0
        %631 = vmatprep.subr.mxu0 0.0
        %632 = vmatpush1.msra.mxu0 0.0
        %633 = vmatprep.subr.mxu0 0.0
        %634 = vmatpush1.msra.mxu0 0.0
        %635 = vmatprep.subr.mxu0 0.0
        %636 = vmatpush1.msra.mxu0 0.0
        %637 = vmatprep.subr.mxu0 0.0
        %638 = vmatpush1.msra.mxu0 0.0
        %639 = vmatprep.subr.mxu0 0.0
        %640 = vmatpush1.msra.mxu0 0.0
        %641 = vmatprep.subr.mxu0 0.0
        %642 = vmatpush1.msra.mxu0 %v607
        %643 = vmatprep.subr.mxu0 0.0
        %644 = vmatpush2.msra.mxu0 0.0
        %645 = vmatprep.subr.mxu0 0.0
        %646 = vmatpush2.msra.mxu0 0.0
        %647 = vmatprep.subr.mxu0 0.0
        %648 = vmatpush2.msra.mxu0 0.0
        %649 = vmatprep.subr.mxu0 0.0
        %650 = vmatpush2.msra.mxu0 0.0
        %651 = vmatprep.subr.mxu0 0.0
        %652 = vmatpush2.msra.mxu0 0.0
        %653 = vmatprep.subr.mxu0 0.0
        %654 = vmatpush2.msra.mxu0 0.0
        %655 = vmatprep.subr.mxu0 0.0
        %656 = vmatpush2.msra.mxu0 0.0
        %657 = vmatprep.subr.mxu0 0.0
        %658 = vmatpush2.msra.mxu0 0.0
        %659 = vmatprep.subr.mxu0 0.0
        %660 = vmatpush2.msra.mxu0 0.0
        %661 = vmatprep.subr.mxu0 0.0
        %662 = vmatpush2.msra.mxu0 0.0
        %663 = vmatprep.subr.mxu0 0.0
        %664 = vmatpush2.msra.mxu0 0.0
        %665 = vmatprep.subr.mxu0 0.0
        %666 = vmatpush2.msra.mxu0 0.0
        %667 = vmatprep.subr.mxu0 0.0
        %668 = vmatpush2.msra.mxu0 0.0
        %669 = vmatprep.subr.mxu0 0.0
        %670 = vmatpush2.msra.mxu0 0.0
        %671 = vmatprep.subr.mxu0 0.0
        %672 = vmatpush2.msra.mxu0 0.0
        %673 = vmatprep.subr.mxu0 0.0
        %674 = vmatpush2.msra.mxu0 0.0
        %675 = vmatprep.mubr.f32.mxu0 0.0
        %676 = vmatmul.mubr.f32.gmra.mxu0 %v609
        %v677 = vpop.f32.mrf.mxu0
        %v678 = vadd.f32 0.0, %v677
        %v679 = vpop.f32.mrf.mxu0
        %680 = vdwg.mxu0
        %681 = vset.pattern.permute.xlu0 4
        %682 = vperm.xlu0 %681, %v358
        %v683 = vpop.permute.xlu0 %682
        %v685 = vmul.f32 %v352, %v683
        %v686 = vmul.f32 %v685, 1.442695
        %v687 = vpow.pop %v686
        %v688 = vrot.slane %v440, 3
        %v689 = vsel %vm366, %v688, 0
        %691 = vmatprep.subr.mxu0 0.0
        %692 = vmatpush1.msra.mxu0 0.0
        %693 = vmatprep.subr.mxu0 0.0
        %694 = vmatpush1.msra.mxu0 0.0
        %695 = vmatprep.subr.mxu0 0.0
        %696 = vmatpush1.msra.mxu0 0.0
        %697 = vmatprep.subr.mxu0 0.0
        %698 = vmatpush1.msra.mxu0 0.0
        %699 = vmatprep.subr.mxu0 0.0
        %700 = vmatpush1.msra.mxu0 0.0
        %701 = vmatprep.subr.mxu0 0.0
        %702 = vmatpush1.msra.mxu0 0.0
        %703 = vmatprep.subr.mxu0 0.0
        %704 = vmatpush1.msra.mxu0 0.0
        %705 = vmatprep.subr.mxu0 0.0
        %706 = vmatpush1.msra.mxu0 0.0
        %707 = vmatprep.subr.mxu0 0.0
        %708 = vmatpush1.msra.mxu0 0.0
        %709 = vmatprep.subr.mxu0 0.0
        %710 = vmatpush1.msra.mxu0 0.0
        %711 = vmatprep.subr.mxu0 0.0
        %712 = vmatpush1.msra.mxu0 0.0
        %713 = vmatprep.subr.mxu0 0.0
        %714 = vmatpush1.msra.mxu0 0.0
        %715 = vmatprep.subr.mxu0 0.0
        %716 = vmatpush1.msra.mxu0 0.0
        %717 = vmatprep.subr.mxu0 0.0
        %718 = vmatpush1.msra.mxu0 0.0
        %719 = vmatprep.subr.mxu0 0.0
        %720 = vmatpush1.msra.mxu0 0.0
        %721 = vmatprep.subr.mxu0 0.0
        %722 = vmatpush1.msra.mxu0 %v687
        %723 = vmatprep.subr.mxu0 0.0
        %724 = vmatpush2.msra.mxu0 0.0
        %725 = vmatprep.subr.mxu0 0.0
        %726 = vmatpush2.msra.mxu0 0.0
        %727 = vmatprep.subr.mxu0 0.0
        %728 = vmatpush2.msra.mxu0 0.0
        %729 = vmatprep.subr.mxu0 0.0
        %730 = vmatpush2.msra.mxu0 0.0
        %731 = vmatprep.subr.mxu0 0.0
        %732 = vmatpush2.msra.mxu0 0.0
        %733 = vmatprep.subr.mxu0 0.0
        %734 = vmatpush2.msra.mxu0 0.0
        %735 = vmatprep.subr.mxu0 0.0
        %736 = vmatpush2.msra.mxu0 0.0
        %737 = vmatprep.subr.mxu0 0.0
        %738 = vmatpush2.msra.mxu0 0.0
        %739 = vmatprep.subr.mxu0 0.0
        %740 = vmatpush2.msra.mxu0 0.0
        %741 = vmatprep.subr.mxu0 0.0
        %742 = vmatpush2.msra.mxu0 0.0
        %743 = vmatprep.subr.mxu0 0.0
        %744 = vmatpush2.msra.mxu0 0.0
        %745 = vmatprep.subr.mxu0 0.0
        %746 = vmatpush2.msra.mxu0 0.0
        %747 = vmatprep.subr.mxu0 0.0
        %748 = vmatpush2.msra.mxu0 0.0
        %749 = vmatprep.subr.mxu0 0.0
        %750 = vmatpush2.msra.mxu0 0.0
        %751 = vmatprep.subr.mxu0 0.0
        %752 = vmatpush2.msra.mxu0 0.0
        %753 = vmatprep.subr.mxu0 0.0
        %754 = vmatpush2.msra.mxu0 0.0
        %755 = vmatprep.mubr.f32.mxu0 0.0
        %756 = vmatmul.mubr.f32.gmra.mxu0 %v689
        %v757 = vpop.f32.mrf.mxu0
        %v758 = vadd.f32 0.0, %v757
        %v759 = vpop.f32.mrf.mxu0
        %760 = vdwg.mxu0
        %v761 = vld [vmem:[#allocation2] sm:$0x1]
        %v762 = vadd.f32 %v761, %v437
        %vm763 = vcmask 122880
        %764 = vst.msk [vmem:[#allocation2] sm:$0x1] %vm763, %v762
        %v765 = vld [vmem:[#allocation2 + $0x1] sm:$0x1]
        %v766 = vadd.f32 %v765, %v518
        %767 = vst.msk [vmem:[#allocation2 + $0x1] sm:$0x1] %vm763, %v766
        %v768 = vld [vmem:[#allocation2 + $0x2] sm:$0x1]
        %v769 = vadd.f32 %v768, %v598
        %770 = vst.msk [vmem:[#allocation2 + $0x2] sm:$0x1] %vm763, %v769
        %v771 = vld [vmem:[#allocation2 + $0x3] sm:$0x1]
        %v772 = vadd.f32 %v771, %v678
        %773 = vst.msk [vmem:[#allocation2 + $0x3] sm:$0x1] %vm763, %v772
        %v774 = vld [vmem:[#allocation2 + $0x4] sm:$0x1]
        %v775 = vadd.f32 %v774, %v758
        %776 = vst.msk [vmem:[#allocation2 + $0x4] sm:$0x1] %vm763, %v775
        // Predicated region
        $region49: #{tpu_custom_call.1} parent=43 // pred_check
          %p777 = pneg %p332
        $region50: #{tpu_custom_call.1} parent=43 // pred_check_branch
          %779 = sbr.rel (%p777) target = $region52
        $region51: #{tpu_custom_call.1} parent=43 // pred_region
          %v780 = vld [vmem:[#allocation2] sm:$0x1f]
          %v781 = vadd.f32 %v780, 1e-08
          %v782 = vrcp.pop %v781
          %v783 = vlaneseq
          %v784 = vshrl.u32 %v783, 7
          %v785 = vsub.s32 0, %v784
          %v786 = vrot.slane %v782, %v785
          %v787 = vmul.f32 %v780, %v786
          %v788 = vlaneseq
          %v789 = vshrl.u32 %v788, 7
          %vm790 = vcmp.eq.s32.totalorder %v789, 0
          %v791 = vsel %vm790, %v780, %v787
          %v792 = vld [vmem:[%s4] sm:$0xff]
          %v793 = vld [vmem:[%s5] sm:$0xff]
          %795 = vset.pattern.permute.xlu0 0
          %796 = vperm.xlu0 %795, %v793
          %v797 = vpop.permute.xlu0 %796
          %vm799 = vcmask 39936
          %v801 = vsel %vm799, %v792, 0
          %vm803 = vcmask 1044480
          %v805 = vsel %vm803, %v791, 0
          %807 = vmatprep.subr.mxu0 0.0
          %808 = vmatpush1.msra.mxu0 0.0
          %809 = vmatprep.subr.mxu0 0.0
          %810 = vmatpush1.msra.mxu0 0.0
          %811 = vmatprep.subr.mxu0 0.0
          %812 = vmatpush1.msra.mxu0 0.0
          %813 = vmatprep.subr.mxu0 0.0
          %814 = vmatpush1.msra.mxu0 0.0
          %815 = vmatprep.subr.mxu0 0.0
          %816 = vmatpush1.msra.mxu0 0.0
          %817 = vmatprep.subr.mxu0 0.0
          %818 = vmatpush1.msra.mxu0 0.0
          %819 = vmatprep.subr.mxu0 0.0
          %820 = vmatpush1.msra.mxu0 0.0
          %821 = vmatprep.subr.mxu0 0.0
          %822 = vmatpush1.msra.mxu0 0.0
          %823 = vmatprep.subr.mxu0 0.0
          %824 = vmatpush1.msra.mxu0 0.0
          %825 = vmatprep.subr.mxu0 0.0
          %826 = vmatpush1.msra.mxu0 0.0
          %827 = vmatprep.subr.mxu0 0.0
          %828 = vmatpush1.msra.mxu0 0.0
          %829 = vmatprep.subr.mxu0 0.0
          %830 = vmatpush1.msra.mxu0 0.0
          %831 = vmatprep.subr.mxu0 0.0
          %832 = vmatpush1.msra.mxu0 0.0
          %833 = vmatprep.subr.mxu0 0.0
          %834 = vmatpush1.msra.mxu0 0.0
          %835 = vmatprep.subr.mxu0 0.0
          %836 = vmatpush1.msra.mxu0 0.0
          %837 = vmatprep.subr.mxu0 0.0
          %838 = vmatpush1.msra.mxu0 %v805
          %839 = vmatprep.subr.mxu0 0.0
          %840 = vmatpush2.msra.mxu0 0.0
          %841 = vmatprep.subr.mxu0 0.0
          %842 = vmatpush2.msra.mxu0 0.0
          %843 = vmatprep.subr.mxu0 0.0
          %844 = vmatpush2.msra.mxu0 0.0
          %845 = vmatprep.subr.mxu0 0.0
          %846 = vmatpush2.msra.mxu0 0.0
          %847 = vmatprep.subr.mxu0 0.0
          %848 = vmatpush2.msra.mxu0 0.0
          %849 = vmatprep.subr.mxu0 0.0
          %850 = vmatpush2.msra.mxu0 0.0
          %851 = vmatprep.subr.mxu0 0.0
          %852 = vmatpush2.msra.mxu0 0.0
          %853 = vmatprep.subr.mxu0 0.0
          %854 = vmatpush2.msra.mxu0 0.0
          %855 = vmatprep.subr.mxu0 0.0
          %856 = vmatpush2.msra.mxu0 0.0
          %857 = vmatprep.subr.mxu0 0.0
          %858 = vmatpush2.msra.mxu0 0.0
          %859 = vmatprep.subr.mxu0 0.0
          %860 = vmatpush2.msra.mxu0 0.0
          %861 = vmatprep.subr.mxu0 0.0
          %862 = vmatpush2.msra.mxu0 0.0
          %863 = vmatprep.subr.mxu0 0.0
          %864 = vmatpush2.msra.mxu0 0.0
          %865 = vmatprep.subr.mxu0 0.0
          %866 = vmatpush2.msra.mxu0 0.0
          %867 = vmatprep.subr.mxu0 0.0
          %868 = vmatpush2.msra.mxu0 0.0
          %869 = vmatprep.subr.mxu0 0.0
          %870 = vmatpush2.msra.mxu0 0.0
          %871 = vmatprep.mubr.f32.mxu0 0.0
          %872 = vmatmul.mubr.f32.gmra.mxu0 %v801
          %v873 = vpop.f32.mrf.mxu0
          %v874 = vadd.f32 %v797, %v873
          %v875 = vpop.f32.mrf.mxu0
          %876 = vdwg.mxu0
          %vm877 = vcmask 130048
          %878 = vst.msk [vmem:[%s311] sm:$0xff] %vm877, %v874
        $region52: #{tpu_custom_call.1} parent=43 // pred_fallthru
          _
        %s879 = sand.u32 %s196, 1
        %s880 = scalar_lea.sflag [#allocation4], %s879
        %s881 = sand.u32 %s196, 1
        %s882 = smul.addr %s881, 8
        %s883 = scalar_lea.vmem [#allocation3], %s882
        // Predicated region
        $region53: #{tpu_custom_call.1} parent=43 // pred_check
          %p884 = pneg %p206
        $region54: #{tpu_custom_call.1} parent=43 // pred_check_branch
          %886 = sbr.rel (%p884) target = $region56
        $region55: #{tpu_custom_call.1} parent=43 // pred_region
          %s888 = ssub.s32 128, 128
          %889 = vsyncadd %s880, %s888
          %s890 = sadd.s32 %s26, %s25
          %s891 = smul.addr %s890, 128
          %s892 = scalar_lea.hbm %s6, %s891
          %s894 = sshll.u32 %s883, 4
          %s895 = int_to_ptr.vmem [resolvable:$true] %s894
          %897 = dma.vmem_to_hbm [thread:$0]  %s895, 128, %s892, %s880
        $region56: #{tpu_custom_call.1} parent=43 // pred_fallthru
          _
      $region44: #{tpu_custom_call.1} parent=5 // pred_fallthru
        _
      %p898 = scmp.le.s32.totalorder 2, %s15
      // Predicated region
      $region57: #{tpu_custom_call.1} parent=5 // pred_check
        %p899 = pneg %p898
      $region58: #{tpu_custom_call.1} parent=5 // pred_check_branch
        %901 = sbr.rel (%p899) target = $region60
      $region59: #{tpu_custom_call.1} parent=5 // pred_region
        %s902 = ssub.s32 %s15, 2
        // Predicated region
        $region61: #{tpu_custom_call.1} parent=59 // pred_check
          %p903 = pneg %p212
        $region62: #{tpu_custom_call.1} parent=59 // pred_check_branch
          %905 = sbr.rel (%p903) target = $region64
        $region63: #{tpu_custom_call.1} parent=59 // pred_region
          %s906 = sand.u32 %s197, 1
          %s907 = scalar_lea.sflag [#allocation4], %s906
          %s908 = sand.u32 %s197, 1
          %s909 = smul.addr %s908, 8
          %s910 = scalar_lea.vmem [#allocation3], %s909
          %911 = dma.done %s907, 128
        $region64: #{tpu_custom_call.1} parent=59 // pred_fallthru
          _
      $region60: #{tpu_custom_call.1} parent=5 // pred_fallthru
        _
    $region6: #{tpu_custom_call.1} parent=1 // loop_footer
      %s19 = sadd.s32 1, %s15
    $region7: #{tpu_custom_call.1} parent=1 // loop_footer_branch
      %14 = sbr.rel target = $region3
    $region8: #{tpu_custom_call.1} parent=1 // loop_exit
      _
    %912 = vsyncpa [#allocation4], 1
    %s913 = scalar_lea.sflag [#allocation4], 1
    %914 = vsyncpa %s913, 1

</llo_original>
